<compile_context>
chip_gen: v5e
topology: v5e:2x2
jax: 0.10.0
libtpu: 0.0.40
codegen_flags: <defaults>
</compile_context>

<pallas_src>
import jax
import jax.numpy as jnp
from jax import lax
from jax.experimental import pallas as pl
from jax.experimental.pallas import tpu as pltpu

# Lane-dense small shapes (last dims are 128-multiples).
B, S, H, FFN = 2, 8, 128, 256
NUM_LABELS = 4
NUM_LABELS_PAD = 128          # classifier output padded to a full 128-lane tile
VOCAB = 64


def _layernorm(x, g, b, eps=1e-5):
    mu = jnp.mean(x, axis=-1, keepdims=True)
    var = jnp.mean((x - mu) ** 2, axis=-1, keepdims=True)
    return (x - mu) * lax.rsqrt(var + eps) * g + b


# ---------------------------------------------------------------------------
# Single fused kernel: encoder layer (last-token path) + Linear head.
# Grid-less: the whole (toy-sized) problem fits in VMEM, one dispatch.
# ---------------------------------------------------------------------------
def fused_forward_kernel(x_ref, xlast_ref,
                         ln1_g_ref, ln1_b_ref,
                         wq_ref, bq_ref, wkv_ref, bkv_ref,
                         wo_ref, bo_ref,
                         ln2_g_ref, ln2_b_ref,
                         w1_ref, b1_ref, w2_ref, b2_ref,
                         wcls_ref, bcls_ref,
                         out_ref):
    x = x_ref[...]            # [B*S, H] all-token residual stream (needed for K/V only)
    xl = xlast_ref[...]       # [B, H]   last-token residual stream (only rows reaching the head)

    # --- attention (pre-LN): K/V over all tokens, Q only for the last token of each batch ---
    h_all = _layernorm(x, ln1_g_ref[...], ln1_b_ref[...])
    kv = jnp.dot(h_all, wkv_ref[...], preferred_element_type=jnp.float32) + bkv_ref[...]
    k = kv[:, :H].reshape(B, S, H)        # 128-aligned lane slices -> no relayout copies
    v = kv[:, H:].reshape(B, S, H)

    h_last = _layernorm(xl, ln1_g_ref[...], ln1_b_ref[...])
    # wq has the 1/sqrt(H) score scale folded in at init time (no per-forward multiply).
    q = (jnp.dot(h_last, wq_ref[...], preferred_element_type=jnp.float32)
         + bq_ref[...]).reshape(B, 1, H)

    scores = jnp.einsum('bqd,bkd->bqk', q, k, preferred_element_type=jnp.float32)   # [B,1,S]
    scores = scores - jnp.max(scores, axis=-1, keepdims=True)
    p = jnp.exp(scores)
    # EUP reciprocal + VPU multiply. Exact fallback: p / jnp.sum(p, -1, keepdims=True).
    attn = p * pl.reciprocal(jnp.sum(p, axis=-1, keepdims=True), approx=True)
    o = jnp.einsum('bqk,bkd->bqd', attn, v,
                   preferred_element_type=jnp.float32).reshape(B, H)
    o = jnp.dot(o, wo_ref[...], preferred_element_type=jnp.float32) + bo_ref[...]
    xr = xl + o                                               # [B, H]

    # --- feed-forward block (pre-LN), last-token rows only ---
    h2 = _layernorm(xr, ln2_g_ref[...], ln2_b_ref[...])
    f = jnp.dot(h2, w1_ref[...], preferred_element_type=jnp.float32) + b1_ref[...]
    f = jax.nn.gelu(f, approximate=True)
    f = jnp.dot(f, w2_ref[...], preferred_element_type=jnp.float32) + b2_ref[...]
    hidden = xr + f                                           # [B, H]

    # --- clsModel head: logits = pooled @ W + b (W/b zero-padded to 128 lanes,
    #     so the final store is a full-lane, unmasked vst) ---
    out_ref[...] = jnp.dot(hidden, wcls_ref[...],
                           preferred_element_type=jnp.float32) + bcls_ref[...]
    # TODO(synk): for real shapes (H>=512, S>=1k): bf16 matmul operands w/ f32 accumulation,
    # a row-tiled grid over B*S with dimension_semantics=("parallel", ...) (v7x megacore) and
    # tiles re-derived for 64 MiB VMEM, flash-style online softmax over a KV axis, and
    # scalar-prefetched embedding gather instead of the wrapper-side jnp.take.


def cls_model_forward(input_ids, params):
    # Embedding + positional lookup (gather stays in the wrapper at these toy sizes).
    x = jnp.take(params["emb"], input_ids, axis=0) + params["pos"][None, :, :]   # [B,S,H]
    x2d = x.reshape(B * S, H)          # pre-flattened: no in-kernel [B,S,H]->[B*S,H] reshape
    x_last = x[:, S - 1, :]            # [B,H] residual stream of the pooled (last) token
    args = (x2d, x_last,
            params["ln1_g"], params["ln1_b"],
            params["wq"], params["bq"], params["wkv"], params["bkv"],
            params["wo"], params["bo"],
            params["ln2_g"], params["ln2_b"],
            params["w1"], params["b1"], params["w2"], params["b2"],
            params["w_cls_pad"], params["b_cls_pad"])
    padded = pl.pallas_call(
        fused_forward_kernel,
        out_shape=jax.ShapeDtypeStruct((B, NUM_LABELS_PAD), jnp.float32),
        in_specs=[pl.BlockSpec(memory_space=pltpu.MemorySpace.VMEM) for _ in args],
        out_specs=pl.BlockSpec(memory_space=pltpu.MemorySpace.VMEM),
    )(*args)
    return padded[:, :NUM_LABELS]
    # TODO(synk): enc_dec=True branch (decoder_input_ids full of pad_token_id) is not modeled;
    # the synthetic backbone is encoder-only, matching the default enc_dec=False path.


def reference_forward(input_ids, params):
    """Pure-JAX reference: FULL forward over all tokens, then last-token pooling + head.

    Validates that the kernel's algebraic shortcut (computing only the last-token path
    through Q / wo / FFN / classifier) matches the un-optimized module semantics.
    """
    x = jnp.take(params["emb"], input_ids, axis=0) + params["pos"][None, :, :]
    x2 = x.reshape(B * S, H)
    h = _layernorm(x2, params["ln1_g"], params["ln1_b"])
    q = (h @ params["wq"] + params["bq"]).reshape(B, S, H)     # scale folded into wq
    kv = h @ params["wkv"] + params["bkv"]
    k = kv[:, :H].reshape(B, S, H)
    v = kv[:, H:].reshape(B, S, H)
    sc = jnp.einsum('bqd,bkd->bqk', q, k)
    attn = jax.nn.softmax(sc, axis=-1)
    o = jnp.einsum('bqk,bkd->bqd', attn, v).reshape(B * S, H)
    x2 = x2 + o @ params["wo"] + params["bo"]
    h2 = _layernorm(x2, params["ln2_g"], params["ln2_b"])
    f = (jax.nn.gelu(h2 @ params["w1"] + params["b1"], approximate=True)
         @ params["w2"] + params["b2"])
    hidden = (x2 + f).reshape(B, S, H)
    pooled = hidden[:, -1, :]
    return pooled @ params["w_cls"] + params["b_cls"]


def init_params(key):
    ks = jax.random.split(key, 8)
    n = lambda k, shp: (0.02 * jax.random.normal(k, shp)).astype(jnp.float32)
    w_cls = n(ks[7], (H, NUM_LABELS))
    b_cls = jnp.zeros((NUM_LABELS,), jnp.float32)
    # Zero-padded head weights -> lane-dense [B, 128] kernel output, sliced in the wrapper.
    w_cls_pad = jnp.zeros((H, NUM_LABELS_PAD), jnp.float32).at[:, :NUM_LABELS].set(w_cls)
    b_cls_pad = jnp.zeros((1, NUM_LABELS_PAD), jnp.float32).at[:, :NUM_LABELS].set(b_cls)
    return {
        "emb": n(ks[0], (VOCAB, H)),
        "pos": n(ks[1], (S, H)),
        "ln1_g": jnp.ones((1, H), jnp.float32), "ln1_b": jnp.zeros((1, H), jnp.float32),
        # Q separate from K/V: only the last token needs Q. 1/sqrt(H) folded into wq.
        "wq": (n(ks[2], (H, H)) * (1.0 / jnp.sqrt(jnp.float32(H)))).astype(jnp.float32),
        "bq": jnp.zeros((1, H), jnp.float32),
        "wkv": n(ks[3], (H, 2 * H)), "bkv": jnp.zeros((1, 2 * H), jnp.float32),
        "wo": n(ks[4], (H, H)), "bo": jnp.zeros((1, H), jnp.float32),
        "ln2_g": jnp.ones((1, H), jnp.float32), "ln2_b": jnp.zeros((1, H), jnp.float32),
        "w1": n(ks[5], (H, FFN)), "b1": jnp.zeros((1, FFN), jnp.float32),
        "w2": n(ks[6], (FFN, H)), "b2": jnp.zeros((1, H), jnp.float32),
        "w_cls": w_cls, "b_cls": b_cls,
        "w_cls_pad": w_cls_pad, "b_cls_pad": b_cls_pad,
    }


if __name__ == "__main__":
    key = jax.random.PRNGKey(0)
    pkey, ikey = jax.random.split(key)
    params = init_params(pkey)
    input_ids = jax.random.randint(ikey, (B, S), 0, VOCAB, dtype=jnp.int32)

    logits = jax.jit(cls_model_forward)(input_ids, params)
    logits = jax.block_until_ready(logits)

    ref = reference_forward(input_ids, params)
    assert logits.shape == (B, NUM_LABELS)
    assert jnp.allclose(logits, ref, atol=1e-3, rtol=1e-3), (logits, ref)
    print("KERNEL_OK")
</pallas_src>

<mosaic_0001>
module attributes {stable_mosaic.version = 11 : i64} {
  func.func @fused_forward_kernel(%arg0: memref<16x128xf32, #tpu.memory_space<vmem>>, %arg1: memref<2x128xf32, #tpu.memory_space<vmem>>, %arg2: memref<1x128xf32, #tpu.memory_space<vmem>>, %arg3: memref<1x128xf32, #tpu.memory_space<vmem>>, %arg4: memref<128x128xf32, #tpu.memory_space<vmem>>, %arg5: memref<1x128xf32, #tpu.memory_space<vmem>>, %arg6: memref<128x256xf32, #tpu.memory_space<vmem>>, %arg7: memref<1x256xf32, #tpu.memory_space<vmem>>, %arg8: memref<128x128xf32, #tpu.memory_space<vmem>>, %arg9: memref<1x128xf32, #tpu.memory_space<vmem>>, %arg10: memref<1x128xf32, #tpu.memory_space<vmem>>, %arg11: memref<1x128xf32, #tpu.memory_space<vmem>>, %arg12: memref<128x256xf32, #tpu.memory_space<vmem>>, %arg13: memref<1x256xf32, #tpu.memory_space<vmem>>, %arg14: memref<256x128xf32, #tpu.memory_space<vmem>>, %arg15: memref<1x128xf32, #tpu.memory_space<vmem>>, %arg16: memref<128x128xf32, #tpu.memory_space<vmem>>, %arg17: memref<1x128xf32, #tpu.memory_space<vmem>>, %arg18: memref<2x128xf32, #tpu.memory_space<vmem>>) attributes {dimension_semantics = [], scalar_prefetch = 0 : i64, scratch_operands = 0 : i64, tpu.core_type = #tpu.core_type<tc>} {
    %c0 = arith.constant 0 : index
    %c0_0 = arith.constant 0 : index
    %0 = vector.load %arg0[%c0, %c0_0] : memref<16x128xf32, #tpu.memory_space<vmem>>, vector<16x128xf32>
    %c0_1 = arith.constant 0 : index
    %c0_2 = arith.constant 0 : index
    %1 = vector.load %arg1[%c0_1, %c0_2] : memref<2x128xf32, #tpu.memory_space<vmem>>, vector<2x128xf32>
    %c0_3 = arith.constant 0 : index
    %c0_4 = arith.constant 0 : index
    %2 = vector.load %arg2[%c0_3, %c0_4] : memref<1x128xf32, #tpu.memory_space<vmem>>, vector<1x128xf32>
    %c0_5 = arith.constant 0 : index
    %c0_6 = arith.constant 0 : index
    %3 = vector.load %arg3[%c0_5, %c0_6] : memref<1x128xf32, #tpu.memory_space<vmem>>, vector<1x128xf32>
    %cst = arith.constant dense<0.000000e+00> : vector<16xf32>
    %4 = vector.multi_reduction <add>, %0, %cst [1] : vector<16x128xf32> to vector<16xf32>
    %5 = vector.shape_cast %4 : vector<16xf32> to vector<16x1xf32>
    %cst_7 = arith.constant 1.280000e+02 : f32
    %6 = vector.broadcast %cst_7 : f32 to vector<16x1xf32>
    %7 = arith.divf %5, %6 : vector<16x1xf32>
    %8 = vector.broadcast %7 : vector<16x1xf32> to vector<16x128xf32>
    %9 = arith.subf %0, %8 : vector<16x128xf32>
    %10 = arith.mulf %9, %9 : vector<16x128xf32>
    %cst_8 = arith.constant dense<0.000000e+00> : vector<16xf32>
    %11 = vector.multi_reduction <add>, %10, %cst_8 [1] : vector<16x128xf32> to vector<16xf32>
    %12 = vector.shape_cast %11 : vector<16xf32> to vector<16x1xf32>
    %cst_9 = arith.constant 1.280000e+02 : f32
    %13 = vector.broadcast %cst_9 : f32 to vector<16x1xf32>
    %14 = arith.divf %12, %13 : vector<16x1xf32>
    %15 = vector.broadcast %7 : vector<16x1xf32> to vector<16x128xf32>
    %16 = arith.subf %0, %15 : vector<16x128xf32>
    %cst_10 = arith.constant 9.99999974E-6 : f32
    %17 = vector.broadcast %cst_10 : f32 to vector<16x1xf32>
    %18 = arith.addf %14, %17 : vector<16x1xf32>
    %19 = math.rsqrt %18 : vector<16x1xf32>
    %20 = vector.broadcast %19 : vector<16x1xf32> to vector<16x128xf32>
    %21 = arith.mulf %16, %20 : vector<16x128xf32>
    %22 = vector.broadcast %2 : vector<1x128xf32> to vector<16x128xf32>
    %23 = arith.mulf %21, %22 : vector<16x128xf32>
    %24 = vector.broadcast %3 : vector<1x128xf32> to vector<16x128xf32>
    %25 = arith.addf %23, %24 : vector<16x128xf32>
    %c0_11 = arith.constant 0 : index
    %c0_12 = arith.constant 0 : index
    %26 = vector.load %arg6[%c0_11, %c0_12] : memref<128x256xf32, #tpu.memory_space<vmem>>, vector<128x256xf32>
    %cst_13 = arith.constant dense<0.000000e+00> : vector<16x256xf32>
    %27 = tpu.matmul %25, %26, %cst_13 {dimension_numbers = #tpu.dot_dimension_numbers<[1], [0], [0], [1], [0, 0, 1, 1], [], []>} : vector<16x128xf32>, vector<128x256xf32>, vector<16x256xf32> -> vector<16x256xf32>
    %c0_14 = arith.constant 0 : index
    %c0_15 = arith.constant 0 : index
    %28 = vector.load %arg7[%c0_14, %c0_15] : memref<1x256xf32, #tpu.memory_space<vmem>>, vector<1x256xf32>
    %29 = vector.broadcast %28 : vector<1x256xf32> to vector<16x256xf32>
    %30 = arith.addf %27, %29 : vector<16x256xf32>
    %31 = vector.extract_strided_slice %30 {offsets = [0, 0], sizes = [16, 128], strides = [1, 1]} : vector<16x256xf32> to vector<16x128xf32>
    %32 = vector.shape_cast %31 : vector<16x128xf32> to vector<2x8x128xf32>
    %33 = vector.extract_strided_slice %30 {offsets = [0, 128], sizes = [16, 128], strides = [1, 1]} : vector<16x256xf32> to vector<16x128xf32>
    %34 = vector.shape_cast %33 : vector<16x128xf32> to vector<2x8x128xf32>
    %c0_16 = arith.constant 0 : index
    %c0_17 = arith.constant 0 : index
    %35 = vector.load %arg2[%c0_16, %c0_17] : memref<1x128xf32, #tpu.memory_space<vmem>>, vector<1x128xf32>
    %c0_18 = arith.constant 0 : index
    %c0_19 = arith.constant 0 : index
    %36 = vector.load %arg3[%c0_18, %c0_19] : memref<1x128xf32, #tpu.memory_space<vmem>>, vector<1x128xf32>
    %cst_20 = arith.constant dense<0.000000e+00> : vector<2xf32>
    %37 = vector.multi_reduction <add>, %1, %cst_20 [1] : vector<2x128xf32> to vector<2xf32>
    %38 = vector.shape_cast %37 : vector<2xf32> to vector<2x1xf32>
    %cst_21 = arith.constant 1.280000e+02 : f32
    %39 = vector.broadcast %cst_21 : f32 to vector<2x1xf32>
    %40 = arith.divf %38, %39 : vector<2x1xf32>
    %41 = vector.broadcast %40 : vector<2x1xf32> to vector<2x128xf32>
    %42 = arith.subf %1, %41 : vector<2x128xf32>
    %43 = arith.mulf %42, %42 : vector<2x128xf32>
    %cst_22 = arith.constant dense<0.000000e+00> : vector<2xf32>
    %44 = vector.multi_reduction <add>, %43, %cst_22 [1] : vector<2x128xf32> to vector<2xf32>
    %45 = vector.shape_cast %44 : vector<2xf32> to vector<2x1xf32>
    %cst_23 = arith.constant 1.280000e+02 : f32
    %46 = vector.broadcast %cst_23 : f32 to vector<2x1xf32>
    %47 = arith.divf %45, %46 : vector<2x1xf32>
    %48 = vector.broadcast %40 : vector<2x1xf32> to vector<2x128xf32>
    %49 = arith.subf %1, %48 : vector<2x128xf32>
    %cst_24 = arith.constant 9.99999974E-6 : f32
    %50 = vector.broadcast %cst_24 : f32 to vector<2x1xf32>
    %51 = arith.addf %47, %50 : vector<2x1xf32>
    %52 = math.rsqrt %51 : vector<2x1xf32>
    %53 = vector.broadcast %52 : vector<2x1xf32> to vector<2x128xf32>
    %54 = arith.mulf %49, %53 : vector<2x128xf32>
    %55 = vector.broadcast %35 : vector<1x128xf32> to vector<2x128xf32>
    %56 = arith.mulf %54, %55 : vector<2x128xf32>
    %57 = vector.broadcast %36 : vector<1x128xf32> to vector<2x128xf32>
    %58 = arith.addf %56, %57 : vector<2x128xf32>
    %c0_25 = arith.constant 0 : index
    %c0_26 = arith.constant 0 : index
    %59 = vector.load %arg4[%c0_25, %c0_26] : memref<128x128xf32, #tpu.memory_space<vmem>>, vector<128x128xf32>
    %cst_27 = arith.constant dense<0.000000e+00> : vector<2x128xf32>
    %60 = tpu.matmul %58, %59, %cst_27 {dimension_numbers = #tpu.dot_dimension_numbers<[1], [0], [0], [1], [0, 0, 1, 1], [], []>} : vector<2x128xf32>, vector<128x128xf32>, vector<2x128xf32> -> vector<2x128xf32>
    %c0_28 = arith.constant 0 : index
    %c0_29 = arith.constant 0 : index
    %61 = vector.load %arg5[%c0_28, %c0_29] : memref<1x128xf32, #tpu.memory_space<vmem>>, vector<1x128xf32>
    %62 = vector.broadcast %61 : vector<1x128xf32> to vector<2x128xf32>
    %63 = arith.addf %60, %62 : vector<2x128xf32>
    %64 = vector.shape_cast %63 : vector<2x128xf32> to vector<2x1x128xf32>
    "tpu.trace_start"() <{level = 10 : i32, message = "bqd,bkd->bqk"}> : () -> ()
    %cst_30 = arith.constant dense<0.000000e+00> : vector<2x1x8xf32>
    %65 = tpu.matmul %64, %32, %cst_30 {dimension_numbers = #tpu.dot_dimension_numbers<[2], [2], [1], [1], [0, 0, 0, 1, 1, 1], [0], [0]>} : vector<2x1x128xf32>, vector<2x8x128xf32>, vector<2x1x8xf32> -> vector<2x1x8xf32>
    "tpu.trace_stop"() : () -> ()
    %cst_31 = arith.constant dense<0xFF800000> : vector<2x1xf32>
    %66 = vector.multi_reduction <maximumf>, %65, %cst_31 [2] : vector<2x1x8xf32> to vector<2x1xf32>
    %67 = vector.shape_cast %66 : vector<2x1xf32> to vector<2x1x1xf32>
    %68 = vector.broadcast %67 : vector<2x1x1xf32> to vector<2x1x8xf32>
    %69 = arith.subf %65, %68 : vector<2x1x8xf32>
    %70 = math.exp %69 : vector<2x1x8xf32>
    %cst_32 = arith.constant dense<0.000000e+00> : vector<2x1xf32>
    %71 = vector.multi_reduction <add>, %70, %cst_32 [2] : vector<2x1x8xf32> to vector<2x1xf32>
    %72 = vector.shape_cast %71 : vector<2x1xf32> to vector<2x1x1xf32>
    %73 = tpu.reciprocal %72 {approx = true} : vector<2x1x1xf32> -> vector<2x1x1xf32>
    %74 = vector.broadcast %73 : vector<2x1x1xf32> to vector<2x1x8xf32>
    %75 = arith.mulf %70, %74 : vector<2x1x8xf32>
    "tpu.trace_start"() <{level = 10 : i32, message = "bqk,bkd->bqd"}> : () -> ()
    %cst_33 = arith.constant dense<0.000000e+00> : vector<2x1x128xf32>
    %76 = tpu.matmul %75, %34, %cst_33 {dimension_numbers = #tpu.dot_dimension_numbers<[2], [1], [1], [2], [0, 0, 0, 1, 1, 2], [0], [0]>} : vector<2x1x8xf32>, vector<2x8x128xf32>, vector<2x1x128xf32> -> vector<2x1x128xf32>
    "tpu.trace_stop"() : () -> ()
    %77 = vector.shape_cast %76 : vector<2x1x128xf32> to vector<2x128xf32>
    %c0_34 = arith.constant 0 : index
    %c0_35 = arith.constant 0 : index
    %78 = vector.load %arg8[%c0_34, %c0_35] : memref<128x128xf32, #tpu.memory_space<vmem>>, vector<128x128xf32>
    %cst_36 = arith.constant dense<0.000000e+00> : vector<2x128xf32>
    %79 = tpu.matmul %77, %78, %cst_36 {dimension_numbers = #tpu.dot_dimension_numbers<[1], [0], [0], [1], [0, 0, 1, 1], [], []>} : vector<2x128xf32>, vector<128x128xf32>, vector<2x128xf32> -> vector<2x128xf32>
    %c0_37 = arith.constant 0 : index
    %c0_38 = arith.constant 0 : index
    %80 = vector.load %arg9[%c0_37, %c0_38] : memref<1x128xf32, #tpu.memory_space<vmem>>, vector<1x128xf32>
    %81 = vector.broadcast %80 : vector<1x128xf32> to vector<2x128xf32>
    %82 = arith.addf %79, %81 : vector<2x128xf32>
    %83 = arith.addf %1, %82 : vector<2x128xf32>
    %c0_39 = arith.constant 0 : index
    %c0_40 = arith.constant 0 : index
    %84 = vector.load %arg10[%c0_39, %c0_40] : memref<1x128xf32, #tpu.memory_space<vmem>>, vector<1x128xf32>
    %c0_41 = arith.constant 0 : index
    %c0_42 = arith.constant 0 : index
    %85 = vector.load %arg11[%c0_41, %c0_42] : memref<1x128xf32, #tpu.memory_space<vmem>>, vector<1x128xf32>
    %cst_43 = arith.constant dense<0.000000e+00> : vector<2xf32>
    %86 = vector.multi_reduction <add>, %83, %cst_43 [1] : vector<2x128xf32> to vector<2xf32>
    %87 = vector.shape_cast %86 : vector<2xf32> to vector<2x1xf32>
    %cst_44 = arith.constant 1.280000e+02 : f32
    %88 = vector.broadcast %cst_44 : f32 to vector<2x1xf32>
    %89 = arith.divf %87, %88 : vector<2x1xf32>
    %90 = vector.broadcast %89 : vector<2x1xf32> to vector<2x128xf32>
    %91 = arith.subf %83, %90 : vector<2x128xf32>
    %92 = arith.mulf %91, %91 : vector<2x128xf32>
    %cst_45 = arith.constant dense<0.000000e+00> : vector<2xf32>
    %93 = vector.multi_reduction <add>, %92, %cst_45 [1] : vector<2x128xf32> to vector<2xf32>
    %94 = vector.shape_cast %93 : vector<2xf32> to vector<2x1xf32>
    %cst_46 = arith.constant 1.280000e+02 : f32
    %95 = vector.broadcast %cst_46 : f32 to vector<2x1xf32>
    %96 = arith.divf %94, %95 : vector<2x1xf32>
    %97 = vector.broadcast %89 : vector<2x1xf32> to vector<2x128xf32>
    %98 = arith.subf %83, %97 : vector<2x128xf32>
    %cst_47 = arith.constant 9.99999974E-6 : f32
    %99 = vector.broadcast %cst_47 : f32 to vector<2x1xf32>
    %100 = arith.addf %96, %99 : vector<2x1xf32>
    %101 = math.rsqrt %100 : vector<2x1xf32>
    %102 = vector.broadcast %101 : vector<2x1xf32> to vector<2x128xf32>
    %103 = arith.mulf %98, %102 : vector<2x128xf32>
    %104 = vector.broadcast %84 : vector<1x128xf32> to vector<2x128xf32>
    %105 = arith.mulf %103, %104 : vector<2x128xf32>
    %106 = vector.broadcast %85 : vector<1x128xf32> to vector<2x128xf32>
    %107 = arith.addf %105, %106 : vector<2x128xf32>
    %c0_48 = arith.constant 0 : index
    %c0_49 = arith.constant 0 : index
    %108 = vector.load %arg12[%c0_48, %c0_49] : memref<128x256xf32, #tpu.memory_space<vmem>>, vector<128x256xf32>
    %cst_50 = arith.constant dense<0.000000e+00> : vector<2x256xf32>
    %109 = tpu.matmul %107, %108, %cst_50 {dimension_numbers = #tpu.dot_dimension_numbers<[1], [0], [0], [1], [0, 0, 1, 1], [], []>} : vector<2x128xf32>, vector<128x256xf32>, vector<2x256xf32> -> vector<2x256xf32>
    %c0_51 = arith.constant 0 : index
    %c0_52 = arith.constant 0 : index
    %110 = vector.load %arg13[%c0_51, %c0_52] : memref<1x256xf32, #tpu.memory_space<vmem>>, vector<1x256xf32>
    %111 = vector.broadcast %110 : vector<1x256xf32> to vector<2x256xf32>
    %112 = arith.addf %109, %111 : vector<2x256xf32>
    %113 = arith.mulf %112, %112 : vector<2x256xf32>
    %114 = arith.mulf %112, %113 : vector<2x256xf32>
    %cst_53 = arith.constant 4.471500e-02 : f32
    %115 = vector.broadcast %cst_53 : f32 to vector<2x256xf32>
    %116 = arith.mulf %115, %114 : vector<2x256xf32>
    %117 = arith.addf %112, %116 : vector<2x256xf32>
    %cst_54 = arith.constant 0.797884583 : f32
    %118 = vector.broadcast %cst_54 : f32 to vector<2x256xf32>
    %119 = arith.mulf %118, %117 : vector<2x256xf32>
    %120 = math.tanh %119 : vector<2x256xf32>
    %cst_55 = arith.constant 1.000000e+00 : f32
    %121 = vector.broadcast %cst_55 : f32 to vector<2x256xf32>
    %122 = arith.addf %121, %120 : vector<2x256xf32>
    %cst_56 = arith.constant 5.000000e-01 : f32
    %123 = vector.broadcast %cst_56 : f32 to vector<2x256xf32>
    %124 = arith.mulf %123, %122 : vector<2x256xf32>
    %125 = arith.mulf %112, %124 : vector<2x256xf32>
    %c0_57 = arith.constant 0 : index
    %c0_58 = arith.constant 0 : index
    %126 = vector.load %arg14[%c0_57, %c0_58] : memref<256x128xf32, #tpu.memory_space<vmem>>, vector<256x128xf32>
    %cst_59 = arith.constant dense<0.000000e+00> : vector<2x128xf32>
    %127 = tpu.matmul %125, %126, %cst_59 {dimension_numbers = #tpu.dot_dimension_numbers<[1], [0], [0], [1], [0, 0, 1, 1], [], []>} : vector<2x256xf32>, vector<256x128xf32>, vector<2x128xf32> -> vector<2x128xf32>
    %c0_60 = arith.constant 0 : index
    %c0_61 = arith.constant 0 : index
    %128 = vector.load %arg15[%c0_60, %c0_61] : memref<1x128xf32, #tpu.memory_space<vmem>>, vector<1x128xf32>
    %129 = vector.broadcast %128 : vector<1x128xf32> to vector<2x128xf32>
    %130 = arith.addf %127, %129 : vector<2x128xf32>
    %131 = arith.addf %83, %130 : vector<2x128xf32>
    %c0_62 = arith.constant 0 : index
    %c0_63 = arith.constant 0 : index
    %132 = vector.load %arg16[%c0_62, %c0_63] : memref<128x128xf32, #tpu.memory_space<vmem>>, vector<128x128xf32>
    %cst_64 = arith.constant dense<0.000000e+00> : vector<2x128xf32>
    %133 = tpu.matmul %131, %132, %cst_64 {dimension_numbers = #tpu.dot_dimension_numbers<[1], [0], [0], [1], [0, 0, 1, 1], [], []>} : vector<2x128xf32>, vector<128x128xf32>, vector<2x128xf32> -> vector<2x128xf32>
    %c0_65 = arith.constant 0 : index
    %c0_66 = arith.constant 0 : index
    %134 = vector.load %arg17[%c0_65, %c0_66] : memref<1x128xf32, #tpu.memory_space<vmem>>, vector<1x128xf32>
    %135 = vector.broadcast %134 : vector<1x128xf32> to vector<2x128xf32>
    %136 = arith.addf %133, %135 : vector<2x128xf32>
    %c0_67 = arith.constant 0 : index
    %c0_68 = arith.constant 0 : index
    %137 = vector.load %arg18[%c0_67, %c0_68] : memref<2x128xf32, #tpu.memory_space<vmem>>, vector<2x128xf32>
    tpu.vector_store %arg18[%c0_67, %c0_68], %136 {strides = array<i32>} : memref<2x128xf32, #tpu.memory_space<vmem>>, vector<2x128xf32>,
    return
  }
}

</mosaic_0001>

<llo_original>
// kernel: cls_model_forward.1
$region0: #{cls_model_forward.1}
  #allocation0 [shape = 'u32[]', space=smem, size = 0x4, offset = 0x4, fixed_abs, tag = 'smem constant byte address 0x4 - core index']
  #allocation1 [shape = 'u32[72,128]{1,0:T(1,128)}', space=vmem, size = 0x9000, scoped, tag = 'internal scratch']
  %s0 = inlined_call_operand.vmem [shape: f32[16,128], index: 0, kind: input, shape index: {}]
  %s1 = inlined_call_operand.vmem [shape: f32[2,128], index: 1, kind: input, shape index: {}]
  %s2 = inlined_call_operand.vmem [shape: f32[1,128], index: 2, kind: input, shape index: {}]
  %s3 = inlined_call_operand.vmem [shape: f32[1,128], index: 3, kind: input, shape index: {}]
  %s4 = inlined_call_operand.vmem [shape: f32[128,128], index: 4, kind: input, shape index: {}]
  %s5 = inlined_call_operand.vmem [shape: f32[1,128], index: 5, kind: input, shape index: {}]
  %s6 = inlined_call_operand.hbm [shape: f32[128,256], index: 6, kind: input, shape index: {}]
  %s7 = inlined_call_operand.vmem [shape: f32[1,256], index: 7, kind: input, shape index: {}]
  %s8 = inlined_call_operand.hbm [shape: f32[128,128], index: 8, kind: input, shape index: {}]
  %s9 = inlined_call_operand.vmem [shape: f32[1,128], index: 9, kind: input, shape index: {}]
  %s10 = inlined_call_operand.vmem [shape: f32[1,128], index: 10, kind: input, shape index: {}]
  %s11 = inlined_call_operand.vmem [shape: f32[1,128], index: 11, kind: input, shape index: {}]
  %s12 = inlined_call_operand.hbm [shape: f32[128,256], index: 12, kind: input, shape index: {}]
  %s13 = inlined_call_operand.vmem [shape: f32[1,256], index: 13, kind: input, shape index: {}]
  %s14 = inlined_call_operand.hbm [shape: f32[256,128], index: 14, kind: input, shape index: {}]
  %s15 = inlined_call_operand.vmem [shape: f32[1,128], index: 15, kind: input, shape index: {}]
  %s16 = inlined_call_operand.hbm [shape: f32[128,128], index: 16, kind: input, shape index: {}]
  %s17 = inlined_call_operand.vmem [shape: f32[1,128], index: 17, kind: input, shape index: {}]
  %s18 = inlined_call_operand.hbm [shape: f32[2,128], index: 18, kind: output, shape index: {}]
  %s19 = sld [smem:[#allocation0]]
  $region102: #{cls_model_forward.1} parent=0
    _
  %s21 = ssub.s32 1, %s19
  %s22 = scalar_select 0, %s21, %s19
  $region1: #{cls_model_forward.1} parent=0
    #allocation2 [shape = 'u8[131072]{0}', space=vmem, size = 0x20000, scoped, tag = 'input window, operand 6, single buffered']
    #allocation3 [shape = 's32[1]{0}', space=sflag, size = 0x4, scoped, tag = 'scoped memory for cls_model_forward.1']
    #allocation4 [shape = 's32[1]{0}', space=sflag, size = 0x4, scoped, tag = 'scoped memory for cls_model_forward.1']
    #allocation5 [shape = 'u8[65536]{0}', space=vmem, size = 0x10000, scoped, tag = 'input window, operand 8, single buffered']
    #allocation6 [shape = 's32[1]{0}', space=sflag, size = 0x4, scoped, tag = 'scoped memory for cls_model_forward.1']
    #allocation7 [shape = 'u8[131072]{0}', space=vmem, size = 0x20000, scoped, tag = 'input window, operand 12, single buffered']
    #allocation8 [shape = 'u8[131072]{0}', space=vmem, size = 0x20000, scoped, tag = 'input window, operand 14, single buffered']
    #allocation9 [shape = 's32[1]{0}', space=sflag, size = 0x4, scoped, tag = 'scoped memory for cls_model_forward.1']
    #allocation10 [shape = 'u8[65536]{0}', space=vmem, size = 0x10000, scoped, tag = 'input window, operand 16, single buffered']
    #allocation11 [shape = 'u8[1024]{0}', space=vmem, size = 0x400, scoped, tag = 'output window, operand 0, single buffered']
    %23 = vsyncpa [#allocation3], 0
    %24 = vsyncpa [#allocation6], 0
    %25 = vsyncpa [#allocation9], 0
    %26 = vsyncpa [#allocation4], 0
    // Predicated region
    $region2: #{cls_model_forward.1} parent=1 // pred_check
      _
    $region3: #{cls_model_forward.1} parent=1 // pred_check_branch
      %28 = sbr.rel (0) target = $region5
    $region4: #{cls_model_forward.1} parent=1 // pred_region
      _
    $region5: #{cls_model_forward.1} parent=1 // pred_fallthru
      _
    // Predicated region
    $region6: #{cls_model_forward.1} parent=1 // pred_check
      _
    $region7: #{cls_model_forward.1} parent=1 // pred_check_branch
      %30 = sbr.rel (0) target = $region9
    $region8: #{cls_model_forward.1} parent=1 // pred_region
      _
    $region9: #{cls_model_forward.1} parent=1 // pred_fallthru
      _
    // Predicated region
    $region10: #{cls_model_forward.1} parent=1 // pred_check
      _
    $region11: #{cls_model_forward.1} parent=1 // pred_check_branch
      %32 = sbr.rel (0) target = $region13
    $region12: #{cls_model_forward.1} parent=1 // pred_region
      _
    $region13: #{cls_model_forward.1} parent=1 // pred_fallthru
      _
    // Predicated region
    $region14: #{cls_model_forward.1} parent=1 // pred_check
      _
    $region15: #{cls_model_forward.1} parent=1 // pred_check_branch
      %34 = sbr.rel (0) target = $region17
    $region16: #{cls_model_forward.1} parent=1 // pred_region
      _
    $region17: #{cls_model_forward.1} parent=1 // pred_fallthru
      _
    // Predicated region
    $region18: #{cls_model_forward.1} parent=1 // pred_check
      _
    $region19: #{cls_model_forward.1} parent=1 // pred_check_branch
      %36 = sbr.rel (0) target = $region21
    $region20: #{cls_model_forward.1} parent=1 // pred_region
      _
    $region21: #{cls_model_forward.1} parent=1 // pred_fallthru
      _
    // Predicated region
    $region22: #{cls_model_forward.1} parent=1 // pred_check
      _
    $region23: #{cls_model_forward.1} parent=1 // pred_check_branch
      %38 = sbr.rel (0) target = $region25
    $region24: #{cls_model_forward.1} parent=1 // pred_region
      _
    $region25: #{cls_model_forward.1} parent=1 // pred_fallthru
      _
    // Predicated region
    $region26: #{cls_model_forward.1} parent=1 // pred_check
      _
    $region27: #{cls_model_forward.1} parent=1 // pred_check_branch
      %40 = sbr.rel (0) target = $region29
    $region28: #{cls_model_forward.1} parent=1 // pred_region
      %42 = vsyncadd [#allocation3], 0
      %s43 = sshll.u32 %s6, 4
      %s44 = int_to_ptr.hbm [resolvable:$true] %s43
      %s45 = sshll.u32 [#allocation2], 4
      %s46 = int_to_ptr.vmem [resolvable:$true] %s45
      %51 = dma.hbm_to_vmem [thread:$0]  %s44, 4096, %s46, [#allocation3], 256, 256, 16
    $region29: #{cls_model_forward.1} parent=1 // pred_fallthru
      _
    // Predicated region
    $region30: #{cls_model_forward.1} parent=1 // pred_check
      _
    $region31: #{cls_model_forward.1} parent=1 // pred_check_branch
      %53 = sbr.rel (0) target = $region33
    $region32: #{cls_model_forward.1} parent=1 // pred_region
      _
    $region33: #{cls_model_forward.1} parent=1 // pred_fallthru
      _
    // Predicated region
    $region34: #{cls_model_forward.1} parent=1 // pred_check
      _
    $region35: #{cls_model_forward.1} parent=1 // pred_check_branch
      %55 = sbr.rel (0) target = $region37
    $region36: #{cls_model_forward.1} parent=1 // pred_region
      %57 = vsyncadd [#allocation6], 0
      %s58 = sshll.u32 %s8, 4
      %s59 = int_to_ptr.hbm [resolvable:$true] %s58
      %s60 = sshll.u32 [#allocation5], 4
      %s61 = int_to_ptr.vmem [resolvable:$true] %s60
      %66 = dma.hbm_to_vmem [thread:$0]  %s59, 2048, %s61, [#allocation6], 128, 128, 8
    $region37: #{cls_model_forward.1} parent=1 // pred_fallthru
      _
    // Predicated region
    $region38: #{cls_model_forward.1} parent=1 // pred_check
      _
    $region39: #{cls_model_forward.1} parent=1 // pred_check_branch
      %68 = sbr.rel (0) target = $region41
    $region40: #{cls_model_forward.1} parent=1 // pred_region
      _
    $region41: #{cls_model_forward.1} parent=1 // pred_fallthru
      _
    // Predicated region
    $region42: #{cls_model_forward.1} parent=1 // pred_check
      _
    $region43: #{cls_model_forward.1} parent=1 // pred_check_branch
      %70 = sbr.rel (0) target = $region45
    $region44: #{cls_model_forward.1} parent=1 // pred_region
      _
    $region45: #{cls_model_forward.1} parent=1 // pred_fallthru
      _
    // Predicated region
    $region46: #{cls_model_forward.1} parent=1 // pred_check
      _
    $region47: #{cls_model_forward.1} parent=1 // pred_check_branch
      %72 = sbr.rel (0) target = $region49
    $region48: #{cls_model_forward.1} parent=1 // pred_region
      _
    $region49: #{cls_model_forward.1} parent=1 // pred_fallthru
      _
    // Predicated region
    $region50: #{cls_model_forward.1} parent=1 // pred_check
      _
    $region51: #{cls_model_forward.1} parent=1 // pred_check_branch
      %74 = sbr.rel (0) target = $region53
    $region52: #{cls_model_forward.1} parent=1 // pred_region
      %76 = vsyncadd [#allocation6], 0
      %s77 = sshll.u32 %s12, 4
      %s78 = int_to_ptr.hbm [resolvable:$true] %s77
      %s79 = sshll.u32 [#allocation7], 4
      %s80 = int_to_ptr.vmem [resolvable:$true] %s79
      %85 = dma.hbm_to_vmem [thread:$0]  %s78, 4096, %s80, [#allocation6], 256, 256, 16
    $region53: #{cls_model_forward.1} parent=1 // pred_fallthru
      _
    // Predicated region
    $region54: #{cls_model_forward.1} parent=1 // pred_check
      _
    $region55: #{cls_model_forward.1} parent=1 // pred_check_branch
      %87 = sbr.rel (0) target = $region57
    $region56: #{cls_model_forward.1} parent=1 // pred_region
      _
    $region57: #{cls_model_forward.1} parent=1 // pred_fallthru
      _
    // Predicated region
    $region58: #{cls_model_forward.1} parent=1 // pred_check
      _
    $region59: #{cls_model_forward.1} parent=1 // pred_check_branch
      %89 = sbr.rel (0) target = $region61
    $region60: #{cls_model_forward.1} parent=1 // pred_region
      %91 = vsyncadd [#allocation9], 0
      %s92 = sshll.u32 %s14, 4
      %s93 = int_to_ptr.hbm [resolvable:$true] %s92
      %s94 = sshll.u32 [#allocation8], 4
      %s95 = int_to_ptr.vmem [resolvable:$true] %s94
      %100 = dma.hbm_to_vmem [thread:$0]  %s93, 4096, %s95, [#allocation9], 128, 128, 8
    $region61: #{cls_model_forward.1} parent=1 // pred_fallthru
      _
    // Predicated region
    $region62: #{cls_model_forward.1} parent=1 // pred_check
      _
    $region63: #{cls_model_forward.1} parent=1 // pred_check_branch
      %102 = sbr.rel (0) target = $region65
    $region64: #{cls_model_forward.1} parent=1 // pred_region
      _
    $region65: #{cls_model_forward.1} parent=1 // pred_fallthru
      _
    // Predicated region
    $region66: #{cls_model_forward.1} parent=1 // pred_check
      _
    $region67: #{cls_model_forward.1} parent=1 // pred_check_branch
      %104 = sbr.rel (0) target = $region69
    $region68: #{cls_model_forward.1} parent=1 // pred_region
      %106 = vsyncadd [#allocation9], 0
      %s107 = sshll.u32 %s16, 4
      %s108 = int_to_ptr.hbm [resolvable:$true] %s107
      %s109 = sshll.u32 [#allocation10], 4
      %s110 = int_to_ptr.vmem [resolvable:$true] %s109
      %115 = dma.hbm_to_vmem [thread:$0]  %s108, 2048, %s110, [#allocation9], 128, 128, 8
    $region69: #{cls_model_forward.1} parent=1 // pred_fallthru
      _
    // Predicated region
    $region70: #{cls_model_forward.1} parent=1 // pred_check
      _
    $region71: #{cls_model_forward.1} parent=1 // pred_check_branch
      %117 = sbr.rel (0) target = $region73
    $region72: #{cls_model_forward.1} parent=1 // pred_region
      _
    $region73: #{cls_model_forward.1} parent=1 // pred_fallthru
      _
    // Predicated region
    $region74: #{cls_model_forward.1} parent=1 // pred_check
      _
    $region75: #{cls_model_forward.1} parent=1 // pred_check_branch
      %119 = sbr.rel (0) target = $region77
    $region76: #{cls_model_forward.1} parent=1 // pred_region
      %121 = dma.done [#allocation3], 4096
    $region77: #{cls_model_forward.1} parent=1 // pred_fallthru
      _
    // Predicated region
    $region78: #{cls_model_forward.1} parent=1 // pred_check
      _
    $region79: #{cls_model_forward.1} parent=1 // pred_check_branch
      %123 = sbr.rel (0) target = $region81
    $region80: #{cls_model_forward.1} parent=1 // pred_region
      %125 = dma.done [#allocation6], 2048
    $region81: #{cls_model_forward.1} parent=1 // pred_fallthru
      _
    // Predicated region
    $region82: #{cls_model_forward.1} parent=1 // pred_check
      _
    $region83: #{cls_model_forward.1} parent=1 // pred_check_branch
      %127 = sbr.rel (0) target = $region85
    $region84: #{cls_model_forward.1} parent=1 // pred_region
      %129 = dma.done [#allocation6], 4096
    $region85: #{cls_model_forward.1} parent=1 // pred_fallthru
      _
    // Predicated region
    $region86: #{cls_model_forward.1} parent=1 // pred_check
      _
    $region87: #{cls_model_forward.1} parent=1 // pred_check_branch
      %131 = sbr.rel (0) target = $region89
    $region88: #{cls_model_forward.1} parent=1 // pred_region
      %133 = dma.done [#allocation9], 4096
    $region89: #{cls_model_forward.1} parent=1 // pred_fallthru
      _
    // Predicated region
    $region90: #{cls_model_forward.1} parent=1 // pred_check
      _
    $region91: #{cls_model_forward.1} parent=1 // pred_check_branch
      %135 = sbr.rel (0) target = $region93
    $region92: #{cls_model_forward.1} parent=1 // pred_region
      %137 = dma.done [#allocation9], 2048
    $region93: #{cls_model_forward.1} parent=1 // pred_fallthru
      _
    %v138 = vld [vmem:[%s0] sm:$0xff]
    %v139 = vld [vmem:[%s0 + $0x8] sm:$0xff]
    %v140 = vld [vmem:[%s1] sm:$0x3]
    %v141 = vld [vmem:[%s2] sm:$0x1]
    %v142 = vld [vmem:[%s3] sm:$0x1]
    %143 = vadd.xlane.f32.xlu0 %v138
    %v144 = vpop.xlane.xlu0 %143
    %145 = vadd.xlane.f32.xlu0 %v139
    %v146 = vpop.xlane.xlu0 %145
    %v147 = vrcp.pop 128.0
    %v148 = vmul.f32 128.0, %v147
    %v149 = vsub.f32 1.0, %v148
    %v150 = vmul.f32 %v147, %v149
    %v151 = vadd.f32 %v147, %v150
    %vm152 = vweird.f32 %v147
    %v153 = vsel %vm152, %v147, %v151
    %v154 = vmul.f32 %v144, %v153
    %v155 = vmul.f32 %v146, %v153
    %v156 = vsub.f32 %v138, %v154
    %v157 = vsub.f32 %v139, %v155
    %v158 = vmul.f32 %v156, %v156
    %v159 = vmul.f32 %v157, %v157
    %160 = vadd.xlane.f32.xlu0 %v158
    %v161 = vpop.xlane.xlu0 %160
    %162 = vadd.xlane.f32.xlu0 %v159
    %v163 = vpop.xlane.xlu0 %162
    %v164 = vmul.f32 %v161, %v153
    %v165 = vmul.f32 %v163, %v153
    %v166 = vadd.f32 %v164, 1e-05
    %v167 = vadd.f32 %v165, 1e-05
    %v168 = vrsqrt.pop %v166
    %v169 = vmul.f32 %v168, %v166
    %v170 = vmul.f32 %v169, %v168
    %v171 = vmul.f32 0.5, %v170
    %v172 = vsub.f32 1.5, %v171
    %v173 = vmul.f32 %v168, %v172
    %vm174 = vweird.f32 %v166
    %vm175 = vweird.f32 %v168
    %vm176 = vmor %vm174, %vm175
    %v177 = vsel %vm176, %v168, %v173
    %v178 = vrsqrt.pop %v167
    %v179 = vmul.f32 %v178, %v167
    %v180 = vmul.f32 %v179, %v178
    %v181 = vmul.f32 0.5, %v180
    %v182 = vsub.f32 1.5, %v181
    %v183 = vmul.f32 %v178, %v182
    %vm184 = vweird.f32 %v167
    %vm185 = vweird.f32 %v178
    %vm186 = vmor %vm184, %vm185
    %v187 = vsel %vm186, %v178, %v183
    %v188 = vmul.f32 %v156, %v177
    %v189 = vmul.f32 %v157, %v187
    %v191 = vperm.slane %v141, 0
    %v193 = vmul.f32 %v188, %v191
    %v194 = vmul.f32 %v189, %v191
    %v196 = vperm.slane %v142, 0
    %v198 = vadd.f32 %v193, %v196
    %v199 = vadd.f32 %v194, %v196
    %v200 = vld [vmem:[#allocation2] sm:$0xff]
    %v201 = vld [vmem:[#allocation2 + $0x8] sm:$0xff]
    %v202 = vld [vmem:[#allocation2 + $0x10] sm:$0xff]
    %v203 = vld [vmem:[#allocation2 + $0x18] sm:$0xff]
    %v204 = vld [vmem:[#allocation2 + $0x20] sm:$0xff]
    %v205 = vld [vmem:[#allocation2 + $0x28] sm:$0xff]
    %v206 = vld [vmem:[#allocation2 + $0x30] sm:$0xff]
    %v207 = vld [vmem:[#allocation2 + $0x38] sm:$0xff]
    %v208 = vld [vmem:[#allocation2 + $0x40] sm:$0xff]
    %v209 = vld [vmem:[#allocation2 + $0x48] sm:$0xff]
    %v210 = vld [vmem:[#allocation2 + $0x50] sm:$0xff]
    %v211 = vld [vmem:[#allocation2 + $0x58] sm:$0xff]
    %v212 = vld [vmem:[#allocation2 + $0x60] sm:$0xff]
    %v213 = vld [vmem:[#allocation2 + $0x68] sm:$0xff]
    %v214 = vld [vmem:[#allocation2 + $0x70] sm:$0xff]
    %v215 = vld [vmem:[#allocation2 + $0x78] sm:$0xff]
    %v216 = vld [vmem:[#allocation2 + $0x80] sm:$0xff]
    %v217 = vld [vmem:[#allocation2 + $0x88] sm:$0xff]
    %v218 = vld [vmem:[#allocation2 + $0x90] sm:$0xff]
    %v219 = vld [vmem:[#allocation2 + $0x98] sm:$0xff]
    %v220 = vld [vmem:[#allocation2 + $0xa0] sm:$0xff]
    %v221 = vld [vmem:[#allocation2 + $0xa8] sm:$0xff]
    %v222 = vld [vmem:[#allocation2 + $0xb0] sm:$0xff]
    %v223 = vld [vmem:[#allocation2 + $0xb8] sm:$0xff]
    %v224 = vld [vmem:[#allocation2 + $0xc0] sm:$0xff]
    %v225 = vld [vmem:[#allocation2 + $0xc8] sm:$0xff]
    %v226 = vld [vmem:[#allocation2 + $0xd0] sm:$0xff]
    %v227 = vld [vmem:[#allocation2 + $0xd8] sm:$0xff]
    %v228 = vld [vmem:[#allocation2 + $0xe0] sm:$0xff]
    %v229 = vld [vmem:[#allocation2 + $0xe8] sm:$0xff]
    %v230 = vld [vmem:[#allocation2 + $0xf0] sm:$0xff]
    %v231 = vld [vmem:[#allocation2 + $0xf8] sm:$0xff]
    %v232 = vld [vmem:[%s7] sm:$0x3]
    %v234 = vperm.slane %v232, 0
    %v235 = vperm.slane %v232, 1
    %238 = vmatpush.msra.mxu0 %v230
    %239 = vmatpush.msra.mxu0 %v228
    %240 = vmatpush.msra.mxu0 %v226
    %241 = vmatpush.msra.mxu0 %v224
    %242 = vmatpush.msra.mxu0 %v222
    %243 = vmatpush.msra.mxu0 %v220
    %244 = vmatpush.msra.mxu0 %v218
    %245 = vmatpush.msra.mxu0 %v216
    %246 = vmatpush.msra.mxu0 %v214
    %247 = vmatpush.msra.mxu0 %v212
    %248 = vmatpush.msra.mxu0 %v210
    %249 = vmatpush.msra.mxu0 %v208
    %250 = vmatpush.msra.mxu0 %v206
    %251 = vmatpush.msra.mxu0 %v204
    %252 = vmatpush.msra.mxu0 %v202
    %253 = vmatpush.msra.mxu0 %v200
    %254 = vmatmul.f32.gmra.mxu0 %v198
    %v255 = vpop.f32.mrf.mxu0
    %v256 = vadd.f32 %v234, %v255
    %257 = vmatmul.f32.gmra.mxu0 %v199
    %v258 = vpop.f32.mrf.mxu0
    %v259 = vadd.f32 %v234, %v258
    %260 = vdwg.mxu0
    %261 = vmatpush.msra.mxu0 %v231
    %262 = vmatpush.msra.mxu0 %v229
    %263 = vmatpush.msra.mxu0 %v227
    %264 = vmatpush.msra.mxu0 %v225
    %265 = vmatpush.msra.mxu0 %v223
    %266 = vmatpush.msra.mxu0 %v221
    %267 = vmatpush.msra.mxu0 %v219
    %268 = vmatpush.msra.mxu0 %v217
    %269 = vmatpush.msra.mxu0 %v215
    %270 = vmatpush.msra.mxu0 %v213
    %271 = vmatpush.msra.mxu0 %v211
    %272 = vmatpush.msra.mxu0 %v209
    %273 = vmatpush.msra.mxu0 %v207
    %274 = vmatpush.msra.mxu0 %v205
    %275 = vmatpush.msra.mxu0 %v203
    %276 = vmatpush.msra.mxu0 %v201
    %277 = vmatmul.f32.gmra.mxu0 %v198
    %v278 = vpop.f32.mrf.mxu0
    %v279 = vadd.f32 %v235, %v278
    %280 = vmatmul.f32.gmra.mxu0 %v199
    %v281 = vpop.f32.mrf.mxu0
    %v282 = vadd.f32 %v235, %v281
    %283 = vdwg.mxu0
    %vm284 = vcmask 1041408
    %v285 = vsel %vm284, %v140, 0.0
    %286 = vadd.xlane.f32.xlu0 %v285
    %v287 = vpop.xlane.xlu0 %286
    %v288 = vmul.f32 %v287, %v153
    %v289 = vsub.f32 %v140, %v288
    %v290 = vmul.f32 %v289, %v289
    %v291 = vsel %vm284, %v290, 0.0
    %292 = vadd.xlane.f32.xlu0 %v291
    %v293 = vpop.xlane.xlu0 %292
    %v294 = vmul.f32 %v293, %v153
    %v295 = vadd.f32 %v294, 1e-05
    %v296 = vrsqrt.pop %v295
    %v297 = vmul.f32 %v296, %v295
    %v298 = vmul.f32 %v297, %v296
    %v299 = vmul.f32 0.5, %v298
    %v300 = vsub.f32 1.5, %v299
    %v301 = vmul.f32 %v296, %v300
    %vm302 = vweird.f32 %v295
    %vm303 = vweird.f32 %v296
    %vm304 = vmor %vm302, %vm303
    %v305 = vsel %vm304, %v296, %v301
    %v306 = vmul.f32 %v289, %v305
    %v307 = vmul.f32 %v306, %v191
    %v308 = vadd.f32 %v307, %v196
    %v309 = vld [vmem:[%s4] sm:$0xff]
    %v310 = vld [vmem:[%s4 + $0x8] sm:$0xff]
    %v311 = vld [vmem:[%s4 + $0x10] sm:$0xff]
    %v312 = vld [vmem:[%s4 + $0x18] sm:$0xff]
    %v313 = vld [vmem:[%s4 + $0x20] sm:$0xff]
    %v314 = vld [vmem:[%s4 + $0x28] sm:$0xff]
    %v315 = vld [vmem:[%s4 + $0x30] sm:$0xff]
    %v316 = vld [vmem:[%s4 + $0x38] sm:$0xff]
    %v317 = vld [vmem:[%s4 + $0x40] sm:$0xff]
    %v318 = vld [vmem:[%s4 + $0x48] sm:$0xff]
    %v319 = vld [vmem:[%s4 + $0x50] sm:$0xff]
    %v320 = vld [vmem:[%s4 + $0x58] sm:$0xff]
    %v321 = vld [vmem:[%s4 + $0x60] sm:$0xff]
    %v322 = vld [vmem:[%s4 + $0x68] sm:$0xff]
    %v323 = vld [vmem:[%s4 + $0x70] sm:$0xff]
    %v324 = vld [vmem:[%s4 + $0x78] sm:$0xff]
    %v325 = vld [vmem:[%s5] sm:$0x1]
    %v327 = vperm.slane %v325, 0
    %329 = vmatpush.msra.mxu0 %v324
    %330 = vmatpush.msra.mxu0 %v323
    %331 = vmatpush.msra.mxu0 %v322
    %332 = vmatpush.msra.mxu0 %v321
    %333 = vmatpush.msra.mxu0 %v320
    %334 = vmatpush.msra.mxu0 %v319
    %335 = vmatpush.msra.mxu0 %v318
    %336 = vmatpush.msra.mxu0 %v317
    %337 = vmatpush.msra.mxu0 %v316
    %338 = vmatpush.msra.mxu0 %v315
    %339 = vmatpush.msra.mxu0 %v314
    %340 = vmatpush.msra.mxu0 %v313
    %341 = vmatpush.msra.mxu0 %v312
    %342 = vmatpush.msra.mxu0 %v311
    %343 = vmatpush.msra.mxu0 %v310
    %344 = vmatpush.msra.mxu0 %v309
    %345 = vmatmul.f32.gmra.mxu0 %v308
    %v346 = vpop.f32.mrf.mxu0
    %v347 = vadd.f32 %v327, %v346
    %348 = vdwg.mxu0
    %v350 = vrot.slane %v347, 1
    %352 = vmatpush.xpose.msra.mxu0 0.0
    %353 = vmatpush.xpose.msra.mxu0 0.0
    %354 = vmatpush.xpose.msra.mxu0 0.0
    %355 = vmatpush.xpose.msra.mxu0 0.0
    %356 = vmatpush.xpose.msra.mxu0 0.0
    %357 = vmatpush.xpose.msra.mxu0 0.0
    %358 = vmatpush.xpose.msra.mxu0 0.0
    %359 = vmatpush.xpose.msra.mxu0 0.0
    %360 = vmatpush.xpose.msra.mxu0 0.0
    %361 = vmatpush.xpose.msra.mxu0 0.0
    %362 = vmatpush.xpose.msra.mxu0 0.0
    %363 = vmatpush.xpose.msra.mxu0 0.0
    %364 = vmatpush.xpose.msra.mxu0 0.0
    %365 = vmatpush.xpose.msra.mxu0 0.0
    %366 = vmatpush.xpose.msra.mxu0 0.0
    %367 = vmatpush.xpose.msra.mxu0 %v256
    %368 = vmatmul.f32.gmra.mxu0 %v347
    %v369 = vpop.f32.mrf.mxu0
    %v370 = vadd.f32 0.0, %v369
    %371 = vdwg.mxu0
    %372 = vmatpush.xpose.msra.mxu0 0.0
    %373 = vmatpush.xpose.msra.mxu0 0.0
    %374 = vmatpush.xpose.msra.mxu0 0.0
    %375 = vmatpush.xpose.msra.mxu0 0.0
    %376 = vmatpush.xpose.msra.mxu0 0.0
    %377 = vmatpush.xpose.msra.mxu0 0.0
    %378 = vmatpush.xpose.msra.mxu0 0.0
    %379 = vmatpush.xpose.msra.mxu0 0.0
    %380 = vmatpush.xpose.msra.mxu0 0.0
    %381 = vmatpush.xpose.msra.mxu0 0.0
    %382 = vmatpush.xpose.msra.mxu0 0.0
    %383 = vmatpush.xpose.msra.mxu0 0.0
    %384 = vmatpush.xpose.msra.mxu0 0.0
    %385 = vmatpush.xpose.msra.mxu0 0.0
    %386 = vmatpush.xpose.msra.mxu0 0.0
    %387 = vmatpush.xpose.msra.mxu0 %v259
    %388 = vmatmul.f32.gmra.mxu0 %v350
    %v389 = vpop.f32.mrf.mxu0
    %v390 = vadd.f32 0.0, %v389
    %391 = vdwg.mxu0
    %vm392 = vcmask 57344
    %v393 = vsel %vm392, %v370, -inf
    %394 = vmax.xlane.f32.xlu0 %v393
    %v395 = vpop.xlane.xlu0 %394
    %v396 = vsel %vm392, %v390, -inf
    %397 = vmax.xlane.f32.xlu0 %v396
    %v398 = vpop.xlane.xlu0 %397
    %v399 = vsub.f32 %v370, %v395
    %v400 = vsub.f32 %v390, %v398
    %v401 = vmul.f32 %v399, 1.442695
    %v402 = vpow.pop %v401
    %v403 = vmul.f32 %v400, 1.442695
    %v404 = vpow.pop %v403
    %v405 = vsel %vm392, %v402, 0.0
    %406 = vadd.xlane.f32.xlu0 %v405
    %v407 = vpop.xlane.xlu0 %406
    %v408 = vsel %vm392, %v404, 0.0
    %409 = vadd.xlane.f32.xlu0 %v408
    %v410 = vpop.xlane.xlu0 %409
    %v411 = vrcp.pop %v407
    %v412 = vrcp.pop %v410
    %v413 = vmul.f32 %v402, %v411
    %v414 = vmul.f32 %v404, %v412
    %vm415 = vcmask 64512
    %v417 = vsel %vm415, %v413, 0
    %419 = vmatpush.msra.mxu0 0.0
    %420 = vmatpush.msra.mxu0 0.0
    %421 = vmatpush.msra.mxu0 0.0
    %422 = vmatpush.msra.mxu0 0.0
    %423 = vmatpush.msra.mxu0 0.0
    %424 = vmatpush.msra.mxu0 0.0
    %425 = vmatpush.msra.mxu0 0.0
    %426 = vmatpush.msra.mxu0 0.0
    %427 = vmatpush.msra.mxu0 0.0
    %428 = vmatpush.msra.mxu0 0.0
    %429 = vmatpush.msra.mxu0 0.0
    %430 = vmatpush.msra.mxu0 0.0
    %431 = vmatpush.msra.mxu0 0.0
    %432 = vmatpush.msra.mxu0 0.0
    %433 = vmatpush.msra.mxu0 0.0
    %434 = vmatpush.msra.mxu0 %v279
    %435 = vmatmul.f32.gmra.mxu0 %v417
    %v436 = vpop.f32.mrf.mxu0
    %v437 = vadd.f32 0.0, %v436
    %438 = vdwg.mxu0
    %v440 = vsel %vm415, %v414, 0
    %442 = vmatpush.msra.mxu0 0.0
    %443 = vmatpush.msra.mxu0 0.0
    %444 = vmatpush.msra.mxu0 0.0
    %445 = vmatpush.msra.mxu0 0.0
    %446 = vmatpush.msra.mxu0 0.0
    %447 = vmatpush.msra.mxu0 0.0
    %448 = vmatpush.msra.mxu0 0.0
    %449 = vmatpush.msra.mxu0 0.0
    %450 = vmatpush.msra.mxu0 0.0
    %451 = vmatpush.msra.mxu0 0.0
    %452 = vmatpush.msra.mxu0 0.0
    %453 = vmatpush.msra.mxu0 0.0
    %454 = vmatpush.msra.mxu0 0.0
    %455 = vmatpush.msra.mxu0 0.0
    %456 = vmatpush.msra.mxu0 0.0
    %457 = vmatpush.msra.mxu0 %v282
    %458 = vmatmul.f32.gmra.mxu0 %v440
    %v459 = vpop.f32.mrf.mxu0
    %v460 = vadd.f32 0.0, %v459
    %461 = vdwg.mxu0
    %v462 = vld [vmem:[#allocation5] sm:$0xff]
    %v463 = vld [vmem:[#allocation5 + $0x8] sm:$0xff]
    %v464 = vld [vmem:[#allocation5 + $0x10] sm:$0xff]
    %v465 = vld [vmem:[#allocation5 + $0x18] sm:$0xff]
    %v466 = vld [vmem:[#allocation5 + $0x20] sm:$0xff]
    %v467 = vld [vmem:[#allocation5 + $0x28] sm:$0xff]
    %v468 = vld [vmem:[#allocation5 + $0x30] sm:$0xff]
    %v469 = vld [vmem:[#allocation5 + $0x38] sm:$0xff]
    %v470 = vld [vmem:[#allocation5 + $0x40] sm:$0xff]
    %v471 = vld [vmem:[#allocation5 + $0x48] sm:$0xff]
    %v472 = vld [vmem:[#allocation5 + $0x50] sm:$0xff]
    %v473 = vld [vmem:[#allocation5 + $0x58] sm:$0xff]
    %v474 = vld [vmem:[#allocation5 + $0x60] sm:$0xff]
    %v475 = vld [vmem:[#allocation5 + $0x68] sm:$0xff]
    %v476 = vld [vmem:[#allocation5 + $0x70] sm:$0xff]
    %v477 = vld [vmem:[#allocation5 + $0x78] sm:$0xff]
    %v478 = vld [vmem:[%s9] sm:$0x1]
    %v480 = vperm.slane %v478, 0
    %v484 = vrot.slane %v460, 7
    %vm485 = vcmask 1041409
    %v486 = vsel %vm485, %v484, %v437
    %488 = vmatpush.msra.mxu0 %v477
    %489 = vmatpush.msra.mxu0 %v476
    %490 = vmatpush.msra.mxu0 %v475
    %491 = vmatpush.msra.mxu0 %v474
    %492 = vmatpush.msra.mxu0 %v473
    %493 = vmatpush.msra.mxu0 %v472
    %494 = vmatpush.msra.mxu0 %v471
    %495 = vmatpush.msra.mxu0 %v470
    %496 = vmatpush.msra.mxu0 %v469
    %497 = vmatpush.msra.mxu0 %v468
    %498 = vmatpush.msra.mxu0 %v467
    %499 = vmatpush.msra.mxu0 %v466
    %500 = vmatpush.msra.mxu0 %v465
    %501 = vmatpush.msra.mxu0 %v464
    %502 = vmatpush.msra.mxu0 %v463
    %503 = vmatpush.msra.mxu0 %v462
    %504 = vmatmul.f32.gmra.mxu0 %v486
    %v505 = vpop.f32.mrf.mxu0
    %v506 = vadd.f32 %v480, %v505
    %507 = vdwg.mxu0
    %v508 = vadd.f32 %v140, %v506
    %v509 = vld [vmem:[%s10] sm:$0x1]
    %v510 = vld [vmem:[%s11] sm:$0x1]
    %v511 = vsel %vm284, %v508, 0.0
    %512 = vadd.xlane.f32.xlu0 %v511
    %v513 = vpop.xlane.xlu0 %512
    %v514 = vmul.f32 %v513, %v153
    %v515 = vsub.f32 %v508, %v514
    %v516 = vmul.f32 %v515, %v515
    %v517 = vsel %vm284, %v516, 0.0
    %518 = vadd.xlane.f32.xlu0 %v517
    %v519 = vpop.xlane.xlu0 %518
    %v520 = vmul.f32 %v519, %v153
    %v521 = vadd.f32 %v520, 1e-05
    %v522 = vrsqrt.pop %v521
    %v523 = vmul.f32 %v522, %v521
    %v524 = vmul.f32 %v523, %v522
    %v525 = vmul.f32 0.5, %v524
    %v526 = vsub.f32 1.5, %v525
    %v527 = vmul.f32 %v522, %v526
    %vm528 = vweird.f32 %v521
    %vm529 = vweird.f32 %v522
    %vm530 = vmor %vm528, %vm529
    %v531 = vsel %vm530, %v522, %v527
    %v532 = vmul.f32 %v515, %v531
    %v534 = vperm.slane %v509, 0
    %v536 = vmul.f32 %v532, %v534
    %v538 = vperm.slane %v510, 0
    %v540 = vadd.f32 %v536, %v538
    %v541 = vld [vmem:[#allocation7] sm:$0xff]
    %v542 = vld [vmem:[#allocation7 + $0x8] sm:$0xff]
    %v543 = vld [vmem:[#allocation7 + $0x10] sm:$0xff]
    %v544 = vld [vmem:[#allocation7 + $0x18] sm:$0xff]
    %v545 = vld [vmem:[#allocation7 + $0x20] sm:$0xff]
    %v546 = vld [vmem:[#allocation7 + $0x28] sm:$0xff]
    %v547 = vld [vmem:[#allocation7 + $0x30] sm:$0xff]
    %v548 = vld [vmem:[#allocation7 + $0x38] sm:$0xff]
    %v549 = vld [vmem:[#allocation7 + $0x40] sm:$0xff]
    %v550 = vld [vmem:[#allocation7 + $0x48] sm:$0xff]
    %v551 = vld [vmem:[#allocation7 + $0x50] sm:$0xff]
    %v552 = vld [vmem:[#allocation7 + $0x58] sm:$0xff]
    %v553 = vld [vmem:[#allocation7 + $0x60] sm:$0xff]
    %v554 = vld [vmem:[#allocation7 + $0x68] sm:$0xff]
    %v555 = vld [vmem:[#allocation7 + $0x70] sm:$0xff]
    %v556 = vld [vmem:[#allocation7 + $0x78] sm:$0xff]
    %v557 = vld [vmem:[#allocation7 + $0x80] sm:$0xff]
    %v558 = vld [vmem:[#allocation7 + $0x88] sm:$0xff]
    %v559 = vld [vmem:[#allocation7 + $0x90] sm:$0xff]
    %v560 = vld [vmem:[#allocation7 + $0x98] sm:$0xff]
    %v561 = vld [vmem:[#allocation7 + $0xa0] sm:$0xff]
    %v562 = vld [vmem:[#allocation7 + $0xa8] sm:$0xff]
    %v563 = vld [vmem:[#allocation7 + $0xb0] sm:$0xff]
    %v564 = vld [vmem:[#allocation7 + $0xb8] sm:$0xff]
    %v565 = vld [vmem:[#allocation7 + $0xc0] sm:$0xff]
    %v566 = vld [vmem:[#allocation7 + $0xc8] sm:$0xff]
    %v567 = vld [vmem:[#allocation7 + $0xd0] sm:$0xff]
    %v568 = vld [vmem:[#allocation7 + $0xd8] sm:$0xff]
    %v569 = vld [vmem:[#allocation7 + $0xe0] sm:$0xff]
    %v570 = vld [vmem:[#allocation7 + $0xe8] sm:$0xff]
    %v571 = vld [vmem:[#allocation7 + $0xf0] sm:$0xff]
    %v572 = vld [vmem:[#allocation7 + $0xf8] sm:$0xff]
    %v573 = vld [vmem:[%s13] sm:$0x3]
    %v575 = vperm.slane %v573, 0
    %v576 = vperm.slane %v573, 1
    %579 = vmatpush.msra.mxu0 %v571
    %580 = vmatpush.msra.mxu0 %v569
    %581 = vmatpush.msra.mxu0 %v567
    %582 = vmatpush.msra.mxu0 %v565
    %583 = vmatpush.msra.mxu0 %v563
    %584 = vmatpush.msra.mxu0 %v561
    %585 = vmatpush.msra.mxu0 %v559
    %586 = vmatpush.msra.mxu0 %v557
    %587 = vmatpush.msra.mxu0 %v555
    %588 = vmatpush.msra.mxu0 %v553
    %589 = vmatpush.msra.mxu0 %v551
    %590 = vmatpush.msra.mxu0 %v549
    %591 = vmatpush.msra.mxu0 %v547
    %592 = vmatpush.msra.mxu0 %v545
    %593 = vmatpush.msra.mxu0 %v543
    %594 = vmatpush.msra.mxu0 %v541
    %595 = vmatmul.f32.gmra.mxu0 %v540
    %v596 = vpop.f32.mrf.mxu0
    %v597 = vadd.f32 %v575, %v596
    %598 = vdwg.mxu0
    %599 = vmatpush.msra.mxu0 %v572
    %600 = vmatpush.msra.mxu0 %v570
    %601 = vmatpush.msra.mxu0 %v568
    %602 = vmatpush.msra.mxu0 %v566
    %603 = vmatpush.msra.mxu0 %v564
    %604 = vmatpush.msra.mxu0 %v562
    %605 = vmatpush.msra.mxu0 %v560
    %606 = vmatpush.msra.mxu0 %v558
    %607 = vmatpush.msra.mxu0 %v556
    %608 = vmatpush.msra.mxu0 %v554
    %609 = vmatpush.msra.mxu0 %v552
    %610 = vmatpush.msra.mxu0 %v550
    %611 = vmatpush.msra.mxu0 %v548
    %612 = vmatpush.msra.mxu0 %v546
    %613 = vmatpush.msra.mxu0 %v544
    %614 = vmatpush.msra.mxu0 %v542
    %615 = vmatmul.f32.gmra.mxu0 %v540
    %v616 = vpop.f32.mrf.mxu0
    %v617 = vadd.f32 %v576, %v616
    %618 = vdwg.mxu0
    %v619 = vmul.f32 %v597, %v597
    %v620 = vmul.f32 %v617, %v617
    %v621 = vmul.f32 %v597, %v619
    %v622 = vmul.f32 %v617, %v620
    %v623 = vmul.f32 %v621, 0.044715
    %v624 = vmul.f32 %v622, 0.044715
    %v625 = vadd.f32 %v597, %v623
    %v626 = vadd.f32 %v617, %v624
    %v627 = vmul.f32 %v625, 0.7978846
    %v628 = vmul.f32 %v626, 0.7978846
    %v629 = vtanh.pop %v627
    %v630 = vtanh.pop %v628
    %v631 = vadd.f32 %v629, 1.0
    %v632 = vadd.f32 %v630, 1.0
    %v633 = vmul.f32 %v631, 0.5
    %v634 = vmul.f32 %v632, 0.5
    %v635 = vmul.f32 %v597, %v633
    %v636 = vmul.f32 %v617, %v634
    %v637 = vld [vmem:[#allocation8] sm:$0xff]
    %v638 = vld [vmem:[#allocation8 + $0x8] sm:$0xff]
    %v639 = vld [vmem:[#allocation8 + $0x10] sm:$0xff]
    %v640 = vld [vmem:[#allocation8 + $0x18] sm:$0xff]
    %v641 = vld [vmem:[#allocation8 + $0x20] sm:$0xff]
    %v642 = vld [vmem:[#allocation8 + $0x28] sm:$0xff]
    %v643 = vld [vmem:[#allocation8 + $0x30] sm:$0xff]
    %v644 = vld [vmem:[#allocation8 + $0x38] sm:$0xff]
    %v645 = vld [vmem:[#allocation8 + $0x40] sm:$0xff]
    %v646 = vld [vmem:[#allocation8 + $0x48] sm:$0xff]
    %v647 = vld [vmem:[#allocation8 + $0x50] sm:$0xff]
    %v648 = vld [vmem:[#allocation8 + $0x58] sm:$0xff]
    %v649 = vld [vmem:[#allocation8 + $0x60] sm:$0xff]
    %v650 = vld [vmem:[#allocation8 + $0x68] sm:$0xff]
    %v651 = vld [vmem:[#allocation8 + $0x70] sm:$0xff]
    %v652 = vld [vmem:[#allocation8 + $0x78] sm:$0xff]
    %v653 = vld [vmem:[#allocation8 + $0x80] sm:$0xff]
    %v654 = vld [vmem:[#allocation8 + $0x88] sm:$0xff]
    %v655 = vld [vmem:[#allocation8 + $0x90] sm:$0xff]
    %v656 = vld [vmem:[#allocation8 + $0x98] sm:$0xff]
    %v657 = vld [vmem:[#allocation8 + $0xa0] sm:$0xff]
    %v658 = vld [vmem:[#allocation8 + $0xa8] sm:$0xff]
    %v659 = vld [vmem:[#allocation8 + $0xb0] sm:$0xff]
    %v660 = vld [vmem:[#allocation8 + $0xb8] sm:$0xff]
    %v661 = vld [vmem:[#allocation8 + $0xc0] sm:$0xff]
    %v662 = vld [vmem:[#allocation8 + $0xc8] sm:$0xff]
    %v663 = vld [vmem:[#allocation8 + $0xd0] sm:$0xff]
    %v664 = vld [vmem:[#allocation8 + $0xd8] sm:$0xff]
    %v665 = vld [vmem:[#allocation8 + $0xe0] sm:$0xff]
    %v666 = vld [vmem:[#allocation8 + $0xe8] sm:$0xff]
    %v667 = vld [vmem:[#allocation8 + $0xf0] sm:$0xff]
    %v668 = vld [vmem:[#allocation8 + $0xf8] sm:$0xff]
    %v669 = vld [vmem:[%s15] sm:$0x1]
    %v671 = vperm.slane %v669, 0
    %673 = vmatpush.msra.mxu0 %v652
    %674 = vmatpush.msra.mxu0 %v651
    %675 = vmatpush.msra.mxu0 %v650
    %676 = vmatpush.msra.mxu0 %v649
    %677 = vmatpush.msra.mxu0 %v648
    %678 = vmatpush.msra.mxu0 %v647
    %679 = vmatpush.msra.mxu0 %v646
    %680 = vmatpush.msra.mxu0 %v645
    %681 = vmatpush.msra.mxu0 %v644
    %682 = vmatpush.msra.mxu0 %v643
    %683 = vmatpush.msra.mxu0 %v642
    %684 = vmatpush.msra.mxu0 %v641
    %685 = vmatpush.msra.mxu0 %v640
    %686 = vmatpush.msra.mxu0 %v639
    %687 = vmatpush.msra.mxu0 %v638
    %688 = vmatpush.msra.mxu0 %v637
    %689 = vmatmul.f32.gmra.mxu0 %v635
    %v690 = vpop.f32.mrf.mxu0
    %v691 = vadd.f32 %v671, %v690
    %692 = vdwg.mxu0
    %693 = vmatpush.msra.mxu0 %v668
    %694 = vmatpush.msra.mxu0 %v667
    %695 = vmatpush.msra.mxu0 %v666
    %696 = vmatpush.msra.mxu0 %v665
    %697 = vmatpush.msra.mxu0 %v664
    %698 = vmatpush.msra.mxu0 %v663
    %699 = vmatpush.msra.mxu0 %v662
    %700 = vmatpush.msra.mxu0 %v661
    %701 = vmatpush.msra.mxu0 %v660
    %702 = vmatpush.msra.mxu0 %v659
    %703 = vmatpush.msra.mxu0 %v658
    %704 = vmatpush.msra.mxu0 %v657
    %705 = vmatpush.msra.mxu0 %v656
    %706 = vmatpush.msra.mxu0 %v655
    %707 = vmatpush.msra.mxu0 %v654
    %708 = vmatpush.msra.mxu0 %v653
    %709 = vmatmul.f32.gmra.mxu0 %v636
    %v710 = vpop.f32.mrf.mxu0
    %v711 = vadd.f32 %v691, %v710
    %712 = vdwg.mxu0
    %v713 = vadd.f32 %v508, %v711
    %v714 = vld [vmem:[#allocation10] sm:$0xff]
    %v715 = vld [vmem:[#allocation10 + $0x8] sm:$0xff]
    %v716 = vld [vmem:[#allocation10 + $0x10] sm:$0xff]
    %v717 = vld [vmem:[#allocation10 + $0x18] sm:$0xff]
    %v718 = vld [vmem:[#allocation10 + $0x20] sm:$0xff]
    %v719 = vld [vmem:[#allocation10 + $0x28] sm:$0xff]
    %v720 = vld [vmem:[#allocation10 + $0x30] sm:$0xff]
    %v721 = vld [vmem:[#allocation10 + $0x38] sm:$0xff]
    %v722 = vld [vmem:[#allocation10 + $0x40] sm:$0xff]
    %v723 = vld [vmem:[#allocation10 + $0x48] sm:$0xff]
    %v724 = vld [vmem:[#allocation10 + $0x50] sm:$0xff]
    %v725 = vld [vmem:[#allocation10 + $0x58] sm:$0xff]
    %v726 = vld [vmem:[#allocation10 + $0x60] sm:$0xff]
    %v727 = vld [vmem:[#allocation10 + $0x68] sm:$0xff]
    %v728 = vld [vmem:[#allocation10 + $0x70] sm:$0xff]
    %v729 = vld [vmem:[#allocation10 + $0x78] sm:$0xff]
    %v730 = vld [vmem:[%s17] sm:$0x1]
    %v732 = vperm.slane %v730, 0
    %734 = vmatpush.msra.mxu0 %v729
    %735 = vmatpush.msra.mxu0 %v728
    %736 = vmatpush.msra.mxu0 %v727
    %737 = vmatpush.msra.mxu0 %v726
    %738 = vmatpush.msra.mxu0 %v725
    %739 = vmatpush.msra.mxu0 %v724
    %740 = vmatpush.msra.mxu0 %v723
    %741 = vmatpush.msra.mxu0 %v722
    %742 = vmatpush.msra.mxu0 %v721
    %743 = vmatpush.msra.mxu0 %v720
    %744 = vmatpush.msra.mxu0 %v719
    %745 = vmatpush.msra.mxu0 %v718
    %746 = vmatpush.msra.mxu0 %v717
    %747 = vmatpush.msra.mxu0 %v716
    %748 = vmatpush.msra.mxu0 %v715
    %749 = vmatpush.msra.mxu0 %v714
    %750 = vmatmul.f32.gmra.mxu0 %v713
    %v751 = vpop.f32.mrf.mxu0
    %v752 = vadd.f32 %v732, %v751
    %753 = vdwg.mxu0
    %754 = vst [vmem:[#allocation11] sm:$0x3] %v752
    // Predicated region
    $region94: #{cls_model_forward.1} parent=1 // pred_check
      _
    $region95: #{cls_model_forward.1} parent=1 // pred_check_branch
      %756 = sbr.rel (0) target = $region97
    $region96: #{cls_model_forward.1} parent=1 // pred_region
      %758 = vsyncadd [#allocation4], 0
      %s760 = sshll.u32 [#allocation11], 4
      %s761 = int_to_ptr.vmem [resolvable:$true] %s760
      %s762 = sshll.u32 %s18, 4
      %s763 = int_to_ptr.hbm [resolvable:$true] %s762
      %765 = dma.vmem_to_hbm [thread:$0]  %s761, 32, %s763, [#allocation4]
    $region97: #{cls_model_forward.1} parent=1 // pred_fallthru
      _
    // Predicated region
    $region98: #{cls_model_forward.1} parent=1 // pred_check
      _
    $region99: #{cls_model_forward.1} parent=1 // pred_check_branch
      %767 = sbr.rel (0) target = $region101
    $region100: #{cls_model_forward.1} parent=1 // pred_region
      %769 = dma.done [#allocation4], 32
    $region101: #{cls_model_forward.1} parent=1 // pred_fallthru
      _
    %770 = vsyncpa [#allocation3], 1
    %771 = vsyncpa [#allocation6], 1
    %772 = vsyncpa [#allocation9], 1
    %773 = vsyncpa [#allocation4], 1

</llo_original>
